<compile_context>
chip_gen: v7x
topology: tpu7x:2x2x1
jax: 0.10.0
libtpu: 0.0.40
codegen_flags: <defaults>
</compile_context>

<pallas_src>
import functools
import math

import jax
import jax.numpy as jnp
from jax.experimental import pallas as pl
from jax.experimental.pallas import tpu as pltpu


def make_pe_table(max_len: int, d_model: int, dtype=jnp.float32) -> jnp.ndarray:
    """Deterministic positional-encoding buffer, identical to the torch __init__."""
    position = jnp.arange(max_len, dtype=jnp.float32)[:, None]                 # (max_len, 1)
    div_term = jnp.exp(
        jnp.arange(0, d_model, 2, dtype=jnp.float32) * (-math.log(10000.0) / d_model)
    )                                                                          # (d_model//2,)
    pe = jnp.zeros((max_len, d_model), dtype=jnp.float32)
    pe = pe.at[:, 0::2].set(jnp.sin(position * div_term))
    pe = pe.at[:, 1::2].set(jnp.cos(position * div_term))
    return pe.astype(dtype)


def _round_up(n: int, m: int) -> int:
    return ((n + m - 1) // m) * m


def _pick_tile(dim: int, unit: int, target: int) -> int:
    """Largest multiple of `unit` that divides `dim` and is <= target.

    If `dim` is not a multiple of `unit` (by construction this only happens for dims
    smaller than one hardware unit, since the wrapper pads larger ragged dims), the whole
    dim is used as a single full-extent block — always legal for BlockSpec and never large
    enough to threaten the VMEM budget.
    """
    if dim <= unit or dim % unit != 0:
        return dim
    best = unit
    cap = min(dim, max(unit, target))
    t = unit
    while t <= cap:
        if dim % t == 0:
            best = t
        t += unit
    return best


def _mix_u32(v):
    """splitmix32-style integer mixer (pure VPU ops: xor / shift / mul)."""
    v = v ^ (v >> jnp.uint32(16))
    v = v * jnp.uint32(0x7FEB352D)
    v = v ^ (v >> jnp.uint32(15))
    v = v * jnp.uint32(0x846CA68B)
    v = v ^ (v >> jnp.uint32(16))
    return v


def _pe_dropout_kernel(seed_ref, x_ref, pe_ref, o_ref, *,
                       p: float, training: bool, use_hw_prng: bool,
                       compute_dtype, tb: int, tc: int):
    # x_ref:  (tb, tc) tile of the flattened (B, S*D) input
    # pe_ref: (1,  tc) tile of the flattened (1, S*D) pe table (sublane-broadcast add)
    y = x_ref[...].astype(compute_dtype) + pe_ref[...].astype(compute_dtype)

    if training and p >= 1.0:
        y = jnp.zeros_like(y)
    elif training and p > 0.0:
        keep_prob = 1.0 - float(p)
        # Clamp: for very small p, int(keep_prob * 2**32) can hit 2**32 and wrap to 0.
        thr = min(int(keep_prob * 4294967296.0), 0xFFFFFFFF)
        threshold = jnp.uint32(thr)
        scale = jnp.asarray(1.0 / keep_prob, dtype=compute_dtype)

        if use_hw_prng:
            # On-chip PRNG: one seed per (column, batch) tile -> independent streams,
            # ~1 op/element instead of ~15 for the software hash.
            pltpu.prng_seed(seed_ref[0], pl.program_id(0), pl.program_id(1))
            bits = pltpu.prng_random_bits((tb, tc))
            if bits.dtype != jnp.uint32:
                bits = pltpu.bitcast(bits, jnp.uint32)
        else:
            # Off-TPU / interpret fallback: counter-based splitmix32 hash (pure VPU ops).
            # TODO(synk): uint32 counter wraps silently if B*S*D exceeds 2**32 elements.
            tile_id = (pl.program_id(0) * pl.num_programs(1)
                       + pl.program_id(1)).astype(jnp.uint32)
            local = (jax.lax.broadcasted_iota(jnp.uint32, (tb, tc), 0) * jnp.uint32(tc)
                     + jax.lax.broadcasted_iota(jnp.uint32, (tb, tc), 1))
            idx = tile_id * jnp.uint32(tb * tc) + local
            seed_u = seed_ref[0].astype(jnp.uint32)
            bits = _mix_u32(idx ^ (seed_u * jnp.uint32(0x9E3779B9)))
            bits = _mix_u32(bits + seed_u)

        keep = bits < threshold
        y = jnp.where(keep, y * scale, jnp.zeros_like(y))

    o_ref[...] = y.astype(o_ref.dtype)


def _jnp_reference_forward(x, pe_table, seed, *, p, training):
    """Plain-XLA path for tiny inputs (kernel dispatch would dominate)."""
    S = x.shape[1]
    y = x + pe_table[None, :S, :].astype(x.dtype)
    if training and p > 0.0:
        key = jax.random.PRNGKey(seed.reshape(-1)[0])
        keep = jax.random.bernoulli(key, 1.0 - p, y.shape)
        y = jnp.where(keep, y / (1.0 - p), jnp.zeros_like(y))
    return y.astype(x.dtype)


def _tpu_generation_hints():
    kind = ""
    try:
        kind = jax.devices()[0].device_kind.lower()
    except Exception:
        pass
    is_v5e = ("v5e" in kind) or ("v5 lite" in kind) or ("v5lite" in kind)
    # 128-MiB-VMEM generations (v4/v5/v6) get bigger blocks + a higher scoped-VMEM limit;
    # v7x (64 MiB physical) and unknown chips stay conservative.
    big_vmem = any(tag in kind for tag in ("v4", "v5", "v6"))
    return is_v5e, big_vmem


def positional_encoding_forward(x, pe_table, seed, *, p=0.1, training=True,
                                force_pallas=False, donate_x=False,
                                min_pallas_bytes=1 << 20):
    """x: (B, S, D). pe_table: (max_len, D). seed: int32[1] (used only when training)."""
    B, S, D = x.shape
    assert pe_table.shape[0] >= S and pe_table.shape[1] == D

    # Tiny inputs: dispatch + DMA setup dominate -> let XLA fuse the plain expression.
    if not force_pallas and x.size * jnp.dtype(x.dtype).itemsize < min_pallas_bytes:
        return _jnp_reference_forward(x, pe_table, seed, p=p, training=training)

    is_v5e, big_vmem = _tpu_generation_hints()
    use_hw_prng = jax.default_backend() == "tpu"

    # bf16 VPU is native on v6e/v7x: skip the f32 promotion there (halves vreg pressure).
    if x.dtype == jnp.bfloat16 and not is_v5e:
        compute_dtype = jnp.bfloat16
    else:
        compute_dtype = jnp.float32

    n_cols = S * D
    x2 = x.reshape(B, n_cols)                                   # lane-dense flatten
    pe2 = pe_table[:S, :].reshape(1, n_cols).astype(x.dtype)

    itemsize = jnp.dtype(x.dtype).itemsize
    row_unit = {4: 8, 2: 16, 1: 32}.get(itemsize, 8)            # dtype-dependent sublanes
    lane_unit = 128

    # Pad ragged dims up to hardware units (instead of a whole-dim block that could bust
    # VMEM / produce masked partial stores).  Sub-unit dims stay as one full block.
    # TODO(synk): for B < row_unit a sequence-fold into the sublane axis would recover the
    # wasted sublanes; left out to keep the pe BlockSpec mapping simple.
    B_pad = B if (B < row_unit or B % row_unit == 0) else _round_up(B, row_unit)
    C_pad = n_cols if (n_cols < lane_unit or n_cols % lane_unit == 0) else _round_up(n_cols, lane_unit)
    if (B_pad, C_pad) != (B, n_cols):
        x2 = jnp.pad(x2, ((0, B_pad - B), (0, C_pad - n_cols)))
        pe2 = jnp.pad(pe2, ((0, 0), (0, C_pad - n_cols)))

    # Generation-split tile targets / scoped-VMEM limit.
    if big_vmem:
        tb_target, tc_target, vmem_limit = 256, 4096, 64 * 1024 * 1024   # ~4 MiB f32 blocks
    else:
        tb_target, tc_target, vmem_limit = 256, 2048, 32 * 1024 * 1024   # ~2 MiB f32 blocks

    tb = _pick_tile(B_pad, row_unit, tb_target)
    # Thin-batch shapes: grow the lane tile so per-block DMAs stay large.
    eff_tc_target = max(tc_target, (tb_target * tc_target) // max(tb, 1))
    tc = _pick_tile(C_pad, lane_unit, eff_tc_target)

    # Columns outer, batch inner -> the (1, tc) pe tile crosses HBM once per column tile.
    grid = (C_pad // tc, B_pad // tb)

    kernel = functools.partial(
        _pe_dropout_kernel, p=float(p), training=bool(training),
        use_hw_prng=use_hw_prng, compute_dtype=compute_dtype, tb=tb, tc=tc)

    # Optional: reuse the (flattened, possibly padded) input buffer for the output.
    # Input index 1 because the scalar-prefetch seed counts as input 0.
    io_aliases = {1: 0} if donate_x else {}

    out2 = pl.pallas_call(
        kernel,
        out_shape=jax.ShapeDtypeStruct((B_pad, C_pad), x.dtype),
        grid_spec=pltpu.PrefetchScalarGridSpec(
            num_scalar_prefetch=1,                     # seed lands in SMEM
            grid=grid,
            in_specs=[
                pl.BlockSpec((tb, tc), lambda c, b, seed: (b, c)),
                pl.BlockSpec((1, tc), lambda c, b, seed: (0, c)),   # constant across batch axis
            ],
            out_specs=pl.BlockSpec((tb, tc), lambda c, b, seed: (b, c)),
        ),
        input_output_aliases=io_aliases,
        compiler_params=pltpu.CompilerParams(
            dimension_semantics=("parallel", "parallel"),
            vmem_limit_bytes=vmem_limit,
        ),
    )(seed, x2, pe2)

    if (B_pad, C_pad) != (B, n_cols):
        out2 = out2[:B, :n_cols]
    return out2.reshape(B, S, D)


if __name__ == "__main__":
    # Small shapes consistent with the module's (batch, seq_len, d_model) contract.
    B, S, D = 2, 8, 32
    MAX_LEN = 5000
    P_DROP = 0.1

    key = jax.random.PRNGKey(0)
    x = jax.random.normal(key, (B, S, D), dtype=jnp.float32)
    pe_table = make_pe_table(MAX_LEN, D, dtype=jnp.float32)
    seed = jnp.array([0], dtype=jnp.int32)

    ref = x + pe_table[None, :S, :]

    # Eval mode (dropout = identity) through the Pallas kernel -> exact match.
    out_eval = jax.block_until_ready(
        positional_encoding_forward(x, pe_table, seed, p=P_DROP, training=False,
                                    force_pallas=True))
    assert out_eval.shape == (B, S, D)
    assert jnp.allclose(out_eval, ref, atol=1e-6, rtol=1e-6)

    # Train mode through the Pallas kernel (hardware PRNG on TPU): every element must be
    # either dropped (0) or kept and scaled by 1/(1-p).
    # TODO(synk): RNG stream intentionally does not bit-match torch's nn.Dropout; same
    # Bernoulli(1-p) keep + 1/(1-p) scale semantics.
    out_train = jax.block_until_ready(
        positional_encoding_forward(x, pe_table, seed, p=P_DROP, training=True,
                                    force_pallas=True))
    assert out_train.shape == (B, S, D)
    scaled = ref / (1.0 - P_DROP)
    ok = jnp.logical_or(jnp.isclose(out_train, 0.0, atol=1e-6),
                        jnp.isclose(out_train, scaled, rtol=1e-5, atol=1e-6))
    assert bool(jnp.all(ok))

    # Tiny-input dispatcher path (plain XLA, no Pallas) stays numerically identical in eval.
    out_small = jax.block_until_ready(
        positional_encoding_forward(x, pe_table, seed, p=P_DROP, training=False))
    assert jnp.allclose(out_small, ref, atol=1e-6, rtol=1e-6)

    print("KERNEL_OK")
</pallas_src>

<mosaic_0001>
module attributes {stable_mosaic.version = 11 : i64} {
  func.func @_pe_dropout_kernel(%arg0: i32, %arg1: i32, %arg2: memref<1xi32, #tpu.memory_space<smem>>, %arg3: memref<2x256xf32, #tpu.memory_space<vmem>>, %arg4: memref<1x256xf32, #tpu.memory_space<vmem>>, %arg5: memref<2x256xf32, #tpu.memory_space<vmem>>) attributes {dimension_semantics = [#tpu.dimension_semantics<parallel>, #tpu.dimension_semantics<parallel>], iteration_bounds = array<i64: 1, 1>, scalar_prefetch = 1 : i64, scratch_operands = 0 : i64, tpu.core_type = #tpu.core_type<tc>, window_params = [{transform_indices = @transform_0, window_bounds = array<i64: 2, 256>}, {transform_indices = @transform_1, window_bounds = array<i64: 1, 256>}, {transform_indices = @transform_2, window_bounds = array<i64: 2, 256>}]} {
    %c0 = arith.constant 0 : index
    %c0_0 = arith.constant 0 : index
    %0 = vector.load %arg3[%c0, %c0_0] : memref<2x256xf32, #tpu.memory_space<vmem>>, vector<2x256xf32>
    %c0_1 = arith.constant 0 : index
    %c0_2 = arith.constant 0 : index
    %1 = vector.load %arg4[%c0_1, %c0_2] : memref<1x256xf32, #tpu.memory_space<vmem>>, vector<1x256xf32>
    %2 = vector.broadcast %1 : vector<1x256xf32> to vector<2x256xf32>
    %3 = arith.addf %0, %2 : vector<2x256xf32>
    %c0_3 = arith.constant 0 : index
    %c0_4 = arith.constant 0 : index
    %4 = vector.load %arg5[%c0_3, %c0_4] : memref<2x256xf32, #tpu.memory_space<vmem>>, vector<2x256xf32>
    tpu.vector_store %arg5[%c0_3, %c0_4], %3 {strides = array<i32>} : memref<2x256xf32, #tpu.memory_space<vmem>>, vector<2x256xf32>,
    return
  }
  func.func @transform_0(%arg0: i32, %arg1: i32, %arg2: memref<1xi32, #tpu.memory_space<smem>>) -> (i32, i32) {
    %c0_i32 = arith.constant 0 : i32
    return %arg1, %arg0 : i32, i32
  }
  func.func @transform_1(%arg0: i32, %arg1: i32, %arg2: memref<1xi32, #tpu.memory_space<smem>>) -> (i32, i32) {
    %c0_i32 = arith.constant 0 : i32
    %c0_i32_0 = arith.constant 0 : i32
    return %c0_i32, %arg0 : i32, i32
  }
  func.func @transform_2(%arg0: i32, %arg1: i32, %arg2: memref<1xi32, #tpu.memory_space<smem>>) -> (i32, i32) {
    %c0_i32 = arith.constant 0 : i32
    return %arg1, %arg0 : i32, i32
  }
}

</mosaic_0001>

<llo_original>
// kernel: tpu_custom_call.1
$region0: #{tpu_custom_call.1}
  #allocation0 [shape = 'u32[]', space=smem, size = 0x4, offset = 0x4, fixed_abs, tag = 'smem constant byte address 0x4 - core index']
  #allocation1 [shape = 'u32[144,128]{1,0:T(1,128)}', space=vmem, size = 0x12000, scoped, tag = 'internal scratch']
  #allocation2 [shape = 's32[1]{0}', space=sflag, size = 0x4, scoped, tag = 'scoped memory for tpu_custom_call.1']
  #allocation3 [shape = 's32[1]{0:T(128)S(6)}', space=smem, size = 0x200, scoped, tag = 'prefetched SMEM operand 0']
  %s0 = inlined_call_operand.<no memory space> [shape: s32[1], index: 0, kind: input, shape index: {}]
  %s1 = inlined_call_operand.hbm [shape: f32[2,256], index: 1, kind: input, shape index: {}]
  %s2 = inlined_call_operand.vmem [shape: f32[1,256], index: 2, kind: input, shape index: {}]
  %s3 = inlined_call_operand.hbm [shape: f32[2,256], index: 3, kind: output, shape index: {}]
  %s4 = sld [smem:[#allocation0]]
  $region22: #{tpu_custom_call.1} parent=0
    _
  %s6 = ssub.s32 1, %s4
  %s7 = scalar_select 0, %s6, %s4
  %8 = sst [smem:[#allocation3]] %s0
  $region1: #{tpu_custom_call.1} parent=0
    #allocation4 [shape = 'u8[2048]{0}', space=vmem, size = 0x800, scoped, tag = 'input window, operand 1, single buffered']
    #allocation5 [shape = 's32[1]{0}', space=sflag, size = 0x4, scoped, tag = 'scoped memory for tpu_custom_call.1']
    #allocation6 [shape = 's32[1]{0}', space=sflag, size = 0x4, scoped, tag = 'scoped memory for tpu_custom_call.1']
    #allocation7 [shape = 'u8[2048]{0}', space=vmem, size = 0x800, scoped, tag = 'output window, operand 0, single buffered']
    %9 = vsyncpa [#allocation5], 0
    %10 = vsyncpa [#allocation6], 0
    // Predicated region
    $region2: #{tpu_custom_call.1} parent=1 // pred_check
      _
    $region3: #{tpu_custom_call.1} parent=1 // pred_check_branch
      %12 = sbr.rel (0) target = $region5
    $region4: #{tpu_custom_call.1} parent=1 // pred_region
      %s14 = ssub.s32 64, 64
      %15 = vsyncadd [#allocation5], %s14
      %s17 = sshll.u32 [#allocation4], 4
      %s18 = int_to_ptr.vmem [resolvable:$true] %s17
      %20 = dma.hbm_to_vmem [thread:$0]  %s1, 64, %s18, [#allocation5]
    $region5: #{tpu_custom_call.1} parent=1 // pred_fallthru
      _
    // Predicated region
    $region6: #{tpu_custom_call.1} parent=1 // pred_check
      _
    $region7: #{tpu_custom_call.1} parent=1 // pred_check_branch
      %22 = sbr.rel (0) target = $region9
    $region8: #{tpu_custom_call.1} parent=1 // pred_region
      _
    $region9: #{tpu_custom_call.1} parent=1 // pred_fallthru
      _
    // Predicated region
    $region10: #{tpu_custom_call.1} parent=1 // pred_check
      _
    $region11: #{tpu_custom_call.1} parent=1 // pred_check_branch
      %24 = sbr.rel (0) target = $region13
    $region12: #{tpu_custom_call.1} parent=1 // pred_region
      %25 = dma.done [#allocation5], 64
    $region13: #{tpu_custom_call.1} parent=1 // pred_fallthru
      _
    %v26 = vld [vmem:[#allocation4] sm:$0xf]
    %v27 = vld [vmem:[%s2] sm:$0x3]
    %v29 = vlaneseq
    %v30 = vshrl.u32 %v29, 7
    %v31 = vsub.s32 0, %v30
    %v32 = vrot.slane %v27, %v31
    %v33 = vlaneseq
    %v34 = vshrl.u32 %v33, 7
    %v35 = vsub.s32 1, %v34
    %v36 = vrot.slane %v27, %v35
    %v37 = vcombine.low %v32, %v36
    %v39 = vunpack.c.l.s4 1983009808
    %v40 = vunpack.c.0.s8 %v39
    %v41 = vlaneseq
    %v42 = vshrl.u32 %v41, 7
    %v43 = vsub.s32 %v40, %v42
    %v44 = vrot.slane %v37, %v43
    %v46 = vadd.f32 %v26, %v44
    %47 = vst [vmem:[#allocation7] sm:$0xf] %v46
    // Predicated region
    $region14: #{tpu_custom_call.1} parent=1 // pred_check
      _
    $region15: #{tpu_custom_call.1} parent=1 // pred_check_branch
      %49 = sbr.rel (0) target = $region17
    $region16: #{tpu_custom_call.1} parent=1 // pred_region
      %s51 = ssub.s32 64, 64
      %52 = vsyncadd [#allocation6], %s51
      %s54 = sshll.u32 [#allocation7], 4
      %s55 = int_to_ptr.vmem [resolvable:$true] %s54
      %57 = dma.vmem_to_hbm [thread:$0]  %s55, 64, %s3, [#allocation6]
    $region17: #{tpu_custom_call.1} parent=1 // pred_fallthru
      _
    // Predicated region
    $region18: #{tpu_custom_call.1} parent=1 // pred_check
      _
    $region19: #{tpu_custom_call.1} parent=1 // pred_check_branch
      %59 = sbr.rel (0) target = $region21
    $region20: #{tpu_custom_call.1} parent=1 // pred_region
      %60 = dma.done [#allocation6], 64
    $region21: #{tpu_custom_call.1} parent=1 // pred_fallthru
      _
    %61 = vsyncpa [#allocation5], 1
    %62 = vsyncpa [#allocation6], 1

</llo_original>
